<compile_context>
chip_gen: v7x
topology: tpu7x:2x2x1
jax: 0.10.0
libtpu: 0.0.40
codegen_flags: <defaults>
</compile_context>

<pallas_src>
import functools
import math

import jax
import jax.numpy as jnp
from jax import lax
from jax.experimental import pallas as pl
from jax.experimental.pallas import tpu as pltpu


def _gelu(g, approximate):
    if approximate:
        return jax.nn.gelu(g, approximate=True)
    # Exact (erf-based) GELU, matching torch.nn.functional.gelu default.
    inv_sqrt2 = jnp.float32(0.7071067811865476)
    return 0.5 * g * (1.0 + lax.erf(g * inv_sqrt2))


def _geglu_kernel_single(x_ref, wh_ref, wg_ref, bh_ref, bg_ref, o_ref,
                         *, use_bf16, approximate):
    # Whole contraction fits one tile: no scratch, fully fused epilogue.
    x = x_ref[...]
    wh = wh_ref[...]
    wg = wg_ref[...]
    if use_bf16:
        x = x.astype(jnp.bfloat16)
        wh = wh.astype(jnp.bfloat16)
        wg = wg.astype(jnp.bfloat16)

    h = jnp.dot(x, wh, preferred_element_type=jnp.float32)
    g = jnp.dot(x, wg, preferred_element_type=jnp.float32)
    h = h + bh_ref[...].astype(jnp.float32)
    g = g + bg_ref[...].astype(jnp.float32)
    o_ref[...] = (h * _gelu(g, approximate)).astype(o_ref.dtype)


def _geglu_kernel_multi(x_ref, wh_ref, wg_ref, bh_ref, bg_ref, o_ref,
                        acc_h, acc_g, *, use_bf16, approximate):
    # x_ref:  (tm, tk)      wh_ref/wg_ref: (tk, tn)    bh_ref/bg_ref: (1, tn)
    # o_ref:  (tm, tn)      acc_h/acc_g:   (tm, tn) f32 scratch accumulators
    k = pl.program_id(2)

    x = x_ref[...]
    wh = wh_ref[...]
    wg = wg_ref[...]
    if use_bf16:
        x = x.astype(jnp.bfloat16)
        wh = wh.astype(jnp.bfloat16)
        wg = wg.astype(jnp.bfloat16)

    ph = jnp.dot(x, wh, preferred_element_type=jnp.float32)
    pg = jnp.dot(x, wg, preferred_element_type=jnp.float32)

    @pl.when(k == 0)
    def _():
        acc_h[...] = ph
        acc_g[...] = pg

    @pl.when(k > 0)
    def _():
        acc_h[...] += ph
        acc_g[...] += pg

    @pl.when(k == pl.num_programs(2) - 1)
    def _():
        h = acc_h[...] + bh_ref[...].astype(jnp.float32)
        g = acc_g[...] + bg_ref[...].astype(jnp.float32)
        o_ref[...] = (h * _gelu(g, approximate)).astype(o_ref.dtype)


def _round_up(a, b):
    return (a + b - 1) // b * b


def _pick_tile(dim, want, align):
    """Largest multiple of `align` that divides `dim` and is <= `want`; else full dim."""
    if dim % align != 0:
        return dim
    t = min(want, dim)
    t = (t // align) * align
    if t <= 0:
        return dim
    while dim % t != 0:
        t -= align
    return t


def geglu(x, w, b, *, tm=256, tn=256, tk=512,
          use_bf16_matmul=False, approximate_gelu=False):
    """x: (..., dim_in), w: (dim_in, 2*dim_out) (= W_pt.T), b: (2*dim_out,)."""
    orig_shape = x.shape
    dim_in = orig_shape[-1]
    two_dout = w.shape[-1]
    dim_out = two_dout // 2

    # Split weight / bias into the two halves so the kernel never slices the
    # projection along the lane dimension.
    w_h = w[:, :dim_out]
    w_g = w[:, dim_out:]
    b_h = b[:dim_out].reshape(1, dim_out)
    b_g = b[dim_out:].reshape(1, dim_out)

    x2d = x.reshape(-1, dim_in)
    m = x2d.shape[0]

    # --- Tile selection (snap to (8, 128)-legal sizes that divide the dims) ---
    m_pad = _round_up(m, 8)
    tm_eff = min(tm, m_pad)
    tm_eff = max(8, (tm_eff // 8) * 8)
    m_pad = _round_up(m_pad, tm_eff)
    if m_pad != m:
        x2d = jnp.pad(x2d, ((0, m_pad - m), (0, 0)))

    tn_eff = _pick_tile(dim_out, tn, 128)
    tk_eff = _pick_tile(dim_in, tk, 128)

    m_tiles = m_pad // tm_eff
    n_tiles = dim_out // tn_eff
    k_tiles = dim_in // tk_eff

    # --- VMEM budget (double-buffered inputs/outputs + f32 accumulators) ---
    in_b = x2d.dtype.itemsize
    w_b = w.dtype.itemsize
    vmem_est = 2 * (tm_eff * tk_eff * in_b            # x tile
                    + 2 * tk_eff * tn_eff * w_b       # w_h, w_g tiles
                    + 2 * tn_eff * w_b                # bias tiles
                    + tm_eff * tn_eff * x.dtype.itemsize)  # out tile
    if k_tiles > 1:
        vmem_est += 2 * tm_eff * tn_eff * 4           # accumulators
    vmem_limit = min(int(vmem_est * 2) + (8 << 20), 64 << 20)  # v7x-safe cap

    if k_tiles == 1:
        kernel = functools.partial(_geglu_kernel_single,
                                   use_bf16=use_bf16_matmul,
                                   approximate=approximate_gelu)
        grid = (m_tiles, n_tiles)
        in_specs = [
            pl.BlockSpec((tm_eff, tk_eff), lambda i, j: (i, 0)),   # x
            pl.BlockSpec((tk_eff, tn_eff), lambda i, j: (0, j)),   # w_h
            pl.BlockSpec((tk_eff, tn_eff), lambda i, j: (0, j)),   # w_g
            pl.BlockSpec((1, tn_eff), lambda i, j: (0, j)),        # b_h
            pl.BlockSpec((1, tn_eff), lambda i, j: (0, j)),        # b_g
        ]
        out_spec = pl.BlockSpec((tm_eff, tn_eff), lambda i, j: (i, j))
        scratch_shapes = []
        dim_sems = ("parallel", "parallel")
    else:
        kernel = functools.partial(_geglu_kernel_multi,
                                   use_bf16=use_bf16_matmul,
                                   approximate=approximate_gelu)
        grid = (m_tiles, n_tiles, k_tiles)
        in_specs = [
            pl.BlockSpec((tm_eff, tk_eff), lambda i, j, k: (i, k)),   # x
            pl.BlockSpec((tk_eff, tn_eff), lambda i, j, k: (k, j)),   # w_h
            pl.BlockSpec((tk_eff, tn_eff), lambda i, j, k: (k, j)),   # w_g
            pl.BlockSpec((1, tn_eff), lambda i, j, k: (0, j)),        # b_h
            pl.BlockSpec((1, tn_eff), lambda i, j, k: (0, j)),        # b_g
        ]
        out_spec = pl.BlockSpec((tm_eff, tn_eff), lambda i, j, k: (i, j))
        scratch_shapes = [
            pltpu.VMEM((tm_eff, tn_eff), jnp.float32),
            pltpu.VMEM((tm_eff, tn_eff), jnp.float32),
        ]
        dim_sems = ("parallel", "parallel", "arbitrary")

    out = pl.pallas_call(
        kernel,
        out_shape=jax.ShapeDtypeStruct((m_pad, dim_out), x.dtype),
        grid_spec=pltpu.PrefetchScalarGridSpec(
            num_scalar_prefetch=0,
            grid=grid,
            in_specs=in_specs,
            out_specs=out_spec,
            scratch_shapes=scratch_shapes,
        ),
        compiler_params=pltpu.CompilerParams(
            dimension_semantics=dim_sems,
            vmem_limit_bytes=vmem_limit,
        ),
    )(x2d, w_h, w_g, b_h, b_g)

    if m_pad != m:
        out = out[:m]
    return out.reshape(*orig_shape[:-1], dim_out)


def _reference(x, w, b, dim_out):
    proj = jnp.einsum("...i,io->...o", x, w) + b
    h, g = proj[..., :dim_out], proj[..., dim_out:]
    return h * (0.5 * g * (1.0 + lax.erf(g / jnp.sqrt(jnp.float32(2.0)))))


def _make_linear_params(key, dim_in, dim_out2, dtype=jnp.float32):
    kw, kb = jax.random.split(key)
    bound = 1.0 / math.sqrt(dim_in)
    w = jax.random.uniform(kw, (dim_in, dim_out2),
                           minval=-bound, maxval=bound, dtype=dtype)
    b = jax.random.uniform(kb, (dim_out2,),
                           minval=-bound, maxval=bound, dtype=dtype)
    return w, b


if __name__ == "__main__":
    key = jax.random.PRNGKey(0)
    k1, k2, k3, k4 = jax.random.split(key, 4)

    # --- Test 1: small shapes, single-K fused path ---
    B, S, DIM_IN, DIM_OUT = 2, 8, 32, 32
    x = jax.random.normal(k1, (B, S, DIM_IN), dtype=jnp.float32)
    w, b = _make_linear_params(k2, DIM_IN, 2 * DIM_OUT)

    out = geglu(x, w, b)
    jax.block_until_ready(out)
    ref = _reference(x, w, b, DIM_OUT)
    assert out.shape == (B, S, DIM_OUT)
    assert jnp.allclose(out, ref, atol=1e-5, rtol=1e-5)

    # --- Test 2: row-padding path (B*S not a multiple of 8 / tm) ---
    x_odd = jax.random.normal(k3, (1, 5, DIM_IN), dtype=jnp.float32)
    out_odd = geglu(x_odd, w, b)
    jax.block_until_ready(out_odd)
    ref_odd = _reference(x_odd, w, b, DIM_OUT)
    assert out_odd.shape == (1, 5, DIM_OUT)
    assert jnp.allclose(out_odd, ref_odd, atol=1e-5, rtol=1e-5)

    # --- Test 3: multi-K accumulator path (tk < dim_in) ---
    DIM_IN2, DIM_OUT2 = 256, 128
    x2 = jax.random.normal(k4, (B, S, DIM_IN2), dtype=jnp.float32)
    w2, b2 = _make_linear_params(k2, DIM_IN2, 2 * DIM_OUT2)
    out2 = geglu(x2, w2, b2, tk=128)   # forces 2 contraction steps
    jax.block_until_ready(out2)
    ref2 = _reference(x2, w2, b2, DIM_OUT2)
    assert out2.shape == (B, S, DIM_OUT2)
    assert jnp.allclose(out2, ref2, atol=1e-4, rtol=1e-5)

    print("KERNEL_OK")
</pallas_src>

<mosaic_0001>
module attributes {stable_mosaic.version = 11 : i64} {
  func.func @_geglu_kernel_single(%arg0: i32, %arg1: i32, %arg2: memref<16x32xf32, #tpu.memory_space<vmem>>, %arg3: memref<32x32xf32, #tpu.memory_space<vmem>>, %arg4: memref<32x32xf32, #tpu.memory_space<vmem>>, %arg5: memref<1x32xf32, #tpu.memory_space<vmem>>, %arg6: memref<1x32xf32, #tpu.memory_space<vmem>>, %arg7: memref<16x32xf32, #tpu.memory_space<vmem>>) attributes {dimension_semantics = [#tpu.dimension_semantics<parallel>, #tpu.dimension_semantics<parallel>], iteration_bounds = array<i64: 1, 1>, scalar_prefetch = 0 : i64, scratch_operands = 0 : i64, tpu.core_type = #tpu.core_type<tc>, window_params = [{transform_indices = @transform_0, window_bounds = array<i64: 16, 32>}, {transform_indices = @transform_1, window_bounds = array<i64: 32, 32>}, {transform_indices = @transform_2, window_bounds = array<i64: 32, 32>}, {transform_indices = @transform_3, window_bounds = array<i64: 1, 32>}, {transform_indices = @transform_4, window_bounds = array<i64: 1, 32>}, {transform_indices = @transform_5, window_bounds = array<i64: 16, 32>}]} {
    %c0 = arith.constant 0 : index
    %c0_0 = arith.constant 0 : index
    %0 = vector.load %arg2[%c0, %c0_0] : memref<16x32xf32, #tpu.memory_space<vmem>>, vector<16x32xf32>
    %c0_1 = arith.constant 0 : index
    %c0_2 = arith.constant 0 : index
    %1 = vector.load %arg3[%c0_1, %c0_2] : memref<32x32xf32, #tpu.memory_space<vmem>>, vector<32x32xf32>
    %c0_3 = arith.constant 0 : index
    %c0_4 = arith.constant 0 : index
    %2 = vector.load %arg4[%c0_3, %c0_4] : memref<32x32xf32, #tpu.memory_space<vmem>>, vector<32x32xf32>
    %cst = arith.constant dense<0.000000e+00> : vector<16x32xf32>
    %3 = tpu.matmul %0, %1, %cst {dimension_numbers = #tpu.dot_dimension_numbers<[1], [0], [0], [1], [0, 0, 1, 1], [], []>} : vector<16x32xf32>, vector<32x32xf32>, vector<16x32xf32> -> vector<16x32xf32>
    %cst_5 = arith.constant dense<0.000000e+00> : vector<16x32xf32>
    %4 = tpu.matmul %0, %2, %cst_5 {dimension_numbers = #tpu.dot_dimension_numbers<[1], [0], [0], [1], [0, 0, 1, 1], [], []>} : vector<16x32xf32>, vector<32x32xf32>, vector<16x32xf32> -> vector<16x32xf32>
    %c0_6 = arith.constant 0 : index
    %c0_7 = arith.constant 0 : index
    %5 = vector.load %arg5[%c0_6, %c0_7] : memref<1x32xf32, #tpu.memory_space<vmem>>, vector<1x32xf32>
    %6 = vector.broadcast %5 : vector<1x32xf32> to vector<16x32xf32>
    %7 = arith.addf %3, %6 : vector<16x32xf32>
    %c0_8 = arith.constant 0 : index
    %c0_9 = arith.constant 0 : index
    %8 = vector.load %arg6[%c0_8, %c0_9] : memref<1x32xf32, #tpu.memory_space<vmem>>, vector<1x32xf32>
    %9 = vector.broadcast %8 : vector<1x32xf32> to vector<16x32xf32>
    %10 = arith.addf %4, %9 : vector<16x32xf32>
    %cst_10 = arith.constant 5.000000e-01 : f32
    %11 = vector.broadcast %cst_10 : f32 to vector<16x32xf32>
    %12 = arith.mulf %11, %10 : vector<16x32xf32>
    %cst_11 = arith.constant 0.707106769 : f32
    %13 = vector.broadcast %cst_11 : f32 to vector<16x32xf32>
    %14 = arith.mulf %10, %13 : vector<16x32xf32>
    %15 = math.erf %14 : vector<16x32xf32>
    %cst_12 = arith.constant 1.000000e+00 : f32
    %16 = vector.broadcast %cst_12 : f32 to vector<16x32xf32>
    %17 = arith.addf %16, %15 : vector<16x32xf32>
    %18 = arith.mulf %12, %17 : vector<16x32xf32>
    %19 = arith.mulf %7, %18 : vector<16x32xf32>
    %c0_13 = arith.constant 0 : index
    %c0_14 = arith.constant 0 : index
    %20 = vector.load %arg7[%c0_13, %c0_14] : memref<16x32xf32, #tpu.memory_space<vmem>>, vector<16x32xf32>
    tpu.vector_store %arg7[%c0_13, %c0_14], %19 {strides = array<i32>} : memref<16x32xf32, #tpu.memory_space<vmem>>, vector<16x32xf32>,
    return
  }
  func.func @transform_0(%arg0: i32, %arg1: i32) -> (i32, i32) {
    %c0_i32 = arith.constant 0 : i32
    %c0_i32_0 = arith.constant 0 : i32
    return %arg0, %c0_i32 : i32, i32
  }
  func.func @transform_1(%arg0: i32, %arg1: i32) -> (i32, i32) {
    %c0_i32 = arith.constant 0 : i32
    %c0_i32_0 = arith.constant 0 : i32
    return %c0_i32, %arg1 : i32, i32
  }
  func.func @transform_2(%arg0: i32, %arg1: i32) -> (i32, i32) {
    %c0_i32 = arith.constant 0 : i32
    %c0_i32_0 = arith.constant 0 : i32
    return %c0_i32, %arg1 : i32, i32
  }
  func.func @transform_3(%arg0: i32, %arg1: i32) -> (i32, i32) {
    %c0_i32 = arith.constant 0 : i32
    %c0_i32_0 = arith.constant 0 : i32
    return %c0_i32, %arg1 : i32, i32
  }
  func.func @transform_4(%arg0: i32, %arg1: i32) -> (i32, i32) {
    %c0_i32 = arith.constant 0 : i32
    %c0_i32_0 = arith.constant 0 : i32
    return %c0_i32, %arg1 : i32, i32
  }
  func.func @transform_5(%arg0: i32, %arg1: i32) -> (i32, i32) {
    %c0_i32 = arith.constant 0 : i32
    return %arg0, %arg1 : i32, i32
  }
}

</mosaic_0001>

<llo_original>
// kernel: tpu_custom_call.1
$region0: #{tpu_custom_call.1}
  #allocation0 [shape = 'u32[]', space=smem, size = 0x4, offset = 0x4, fixed_abs, tag = 'smem constant byte address 0x4 - core index']
  #allocation1 [shape = 'u32[144,128]{1,0:T(1,128)}', space=vmem, size = 0x12000, scoped, tag = 'internal scratch']
  %s0 = inlined_call_operand.hbm [shape: f32[16,32], index: 0, kind: input, shape index: {}]
  %s1 = inlined_call_operand.hbm [shape: f32[32,32], index: 1, kind: input, shape index: {}]
  %s2 = inlined_call_operand.hbm [shape: f32[32,32], index: 2, kind: input, shape index: {}]
  %s3 = inlined_call_operand.vmem [shape: f32[1,32], index: 3, kind: input, shape index: {}]
  %s4 = inlined_call_operand.vmem [shape: f32[1,32], index: 4, kind: input, shape index: {}]
  %s5 = inlined_call_operand.hbm [shape: f32[16,32], index: 5, kind: output, shape index: {}]
  %s6 = sld [smem:[#allocation0]]
  $region42: #{tpu_custom_call.1} parent=0
    _
  %s8 = ssub.s32 1, %s6
  %s9 = scalar_select 0, %s8, %s6
  $region1: #{tpu_custom_call.1} parent=0
    #allocation2 [shape = 'u8[8192]{0}', space=vmem, size = 0x2000, scoped, tag = 'input window, operand 0, single buffered']
    #allocation3 [shape = 's32[1]{0}', space=sflag, size = 0x4, scoped, tag = 'scoped memory for tpu_custom_call.1']
    #allocation4 [shape = 's32[1]{0}', space=sflag, size = 0x4, scoped, tag = 'scoped memory for tpu_custom_call.1']
    #allocation5 [shape = 'u8[16384]{0}', space=vmem, size = 0x4000, scoped, tag = 'input window, operand 1, single buffered']
    #allocation6 [shape = 's32[1]{0}', space=sflag, size = 0x4, scoped, tag = 'scoped memory for tpu_custom_call.1']
    #allocation7 [shape = 'u8[16384]{0}', space=vmem, size = 0x4000, scoped, tag = 'input window, operand 2, single buffered']
    #allocation8 [shape = 'u8[8192]{0}', space=vmem, size = 0x2000, scoped, tag = 'output window, operand 0, single buffered']
    %10 = vsyncpa [#allocation3], 0
    %11 = vsyncpa [#allocation6], 0
    %12 = vsyncpa [#allocation4], 0
    // Predicated region
    $region2: #{tpu_custom_call.1} parent=1 // pred_check
      _
    $region3: #{tpu_custom_call.1} parent=1 // pred_check_branch
      %14 = sbr.rel (0) target = $region5
    $region4: #{tpu_custom_call.1} parent=1 // pred_region
      %s16 = ssub.s32 256, 256
      %17 = vsyncadd [#allocation3], %s16
      %s18 = sshll.u32 [#allocation2], 4
      %s19 = int_to_ptr.vmem [resolvable:$true] %s18
      %24 = dma.hbm_to_vmem [thread:$0]  %s0, 256, %s19, [#allocation3], 128, 128, 8
    $region5: #{tpu_custom_call.1} parent=1 // pred_fallthru
      _
    // Predicated region
    $region6: #{tpu_custom_call.1} parent=1 // pred_check
      _
    $region7: #{tpu_custom_call.1} parent=1 // pred_check_branch
      %26 = sbr.rel (0) target = $region9
    $region8: #{tpu_custom_call.1} parent=1 // pred_region
      %s28 = ssub.s32 512, 512
      %29 = vsyncadd [#allocation6], %s28
      %s30 = sshll.u32 [#allocation5], 4
      %s31 = int_to_ptr.vmem [resolvable:$true] %s30
      %36 = dma.hbm_to_vmem [thread:$0]  %s1, 512, %s31, [#allocation6], 128, 128, 8
    $region9: #{tpu_custom_call.1} parent=1 // pred_fallthru
      _
    // Predicated region
    $region10: #{tpu_custom_call.1} parent=1 // pred_check
      _
    $region11: #{tpu_custom_call.1} parent=1 // pred_check_branch
      %38 = sbr.rel (0) target = $region13
    $region12: #{tpu_custom_call.1} parent=1 // pred_region
      %s40 = ssub.s32 512, 512
      %41 = vsyncadd [#allocation6], %s40
      %s42 = sshll.u32 [#allocation7], 4
      %s43 = int_to_ptr.vmem [resolvable:$true] %s42
      %48 = dma.hbm_to_vmem [thread:$0]  %s2, 512, %s43, [#allocation6], 128, 128, 8
    $region13: #{tpu_custom_call.1} parent=1 // pred_fallthru
      _
    // Predicated region
    $region14: #{tpu_custom_call.1} parent=1 // pred_check
      _
    $region15: #{tpu_custom_call.1} parent=1 // pred_check_branch
      %50 = sbr.rel (0) target = $region17
    $region16: #{tpu_custom_call.1} parent=1 // pred_region
      _
    $region17: #{tpu_custom_call.1} parent=1 // pred_fallthru
      _
    // Predicated region
    $region18: #{tpu_custom_call.1} parent=1 // pred_check
      _
    $region19: #{tpu_custom_call.1} parent=1 // pred_check_branch
      %52 = sbr.rel (0) target = $region21
    $region20: #{tpu_custom_call.1} parent=1 // pred_region
      _
    $region21: #{tpu_custom_call.1} parent=1 // pred_fallthru
      _
    // Predicated region
    $region22: #{tpu_custom_call.1} parent=1 // pred_check
      _
    $region23: #{tpu_custom_call.1} parent=1 // pred_check_branch
      %54 = sbr.rel (0) target = $region25
    $region24: #{tpu_custom_call.1} parent=1 // pred_region
      %55 = dma.done [#allocation3], 256
    $region25: #{tpu_custom_call.1} parent=1 // pred_fallthru
      _
    // Predicated region
    $region26: #{tpu_custom_call.1} parent=1 // pred_check
      _
    $region27: #{tpu_custom_call.1} parent=1 // pred_check_branch
      %57 = sbr.rel (0) target = $region29
    $region28: #{tpu_custom_call.1} parent=1 // pred_region
      %58 = dma.done [#allocation6], 512
    $region29: #{tpu_custom_call.1} parent=1 // pred_fallthru
      _
    // Predicated region
    $region30: #{tpu_custom_call.1} parent=1 // pred_check
      _
    $region31: #{tpu_custom_call.1} parent=1 // pred_check_branch
      %60 = sbr.rel (0) target = $region33
    $region32: #{tpu_custom_call.1} parent=1 // pred_region
      %61 = dma.done [#allocation6], 512
    $region33: #{tpu_custom_call.1} parent=1 // pred_fallthru
      _
    %v62 = vld [vmem:[#allocation2] sm:$0xff]
    %v63 = vld [vmem:[#allocation2 + $0x8] sm:$0xff]
    %v64 = vld [vmem:[#allocation5] sm:$0xff]
    %v65 = vld [vmem:[#allocation5 + $0x8] sm:$0xff]
    %v66 = vld [vmem:[#allocation5 + $0x10] sm:$0xff]
    %v67 = vld [vmem:[#allocation5 + $0x18] sm:$0xff]
    %v68 = vld [vmem:[#allocation7] sm:$0xff]
    %v69 = vld [vmem:[#allocation7 + $0x8] sm:$0xff]
    %v70 = vld [vmem:[#allocation7 + $0x10] sm:$0xff]
    %v71 = vld [vmem:[#allocation7 + $0x18] sm:$0xff]
    %v72 = vld [vmem:[%s3] sm:$0x1]
    %v74 = vlaneseq
    %v75 = vshrl.u32 %v74, 7
    %v76 = vsub.s32 0, %v75
    %v77 = vrot.slane %v72, %v76
    %vm79 = vcmask 261120
    %v81 = vsel %vm79, %v62, 0
    %v84 = vsel %vm79, %v63, 0
    %86 = vmatprep.subr.mxu0 0.0
    %87 = vmatpush1.msra.mxu0 %v64
    %88 = vmatprep.subr.mxu0 0.0
    %89 = vmatpush1.msra.mxu0 %v65
    %90 = vmatprep.subr.mxu0 0.0
    %91 = vmatpush1.msra.mxu0 %v66
    %92 = vmatprep.subr.mxu0 0.0
    %93 = vmatpush1.msra.mxu0 %v67
    %94 = vmatprep.subr.mxu0 0.0
    %95 = vmatpush1.msra.mxu0 0.0
    %96 = vmatprep.subr.mxu0 0.0
    %97 = vmatpush1.msra.mxu0 0.0
    %98 = vmatprep.subr.mxu0 0.0
    %99 = vmatpush1.msra.mxu0 0.0
    %100 = vmatprep.subr.mxu0 0.0
    %101 = vmatpush1.msra.mxu0 0.0
    %102 = vmatprep.subr.mxu0 0.0
    %103 = vmatpush1.msra.mxu0 0.0
    %104 = vmatprep.subr.mxu0 0.0
    %105 = vmatpush1.msra.mxu0 0.0
    %106 = vmatprep.subr.mxu0 0.0
    %107 = vmatpush1.msra.mxu0 0.0
    %108 = vmatprep.subr.mxu0 0.0
    %109 = vmatpush1.msra.mxu0 0.0
    %110 = vmatprep.subr.mxu0 0.0
    %111 = vmatpush1.msra.mxu0 0.0
    %112 = vmatprep.subr.mxu0 0.0
    %113 = vmatpush1.msra.mxu0 0.0
    %114 = vmatprep.subr.mxu0 0.0
    %115 = vmatpush1.msra.mxu0 0.0
    %116 = vmatprep.subr.mxu0 0.0
    %117 = vmatpush1.msra.mxu0 0.0
    %118 = vmatprep.subr.mxu0 0.0
    %119 = vmatpush1.msra.mxu0 0.0
    %120 = vmatprep.subr.mxu0 0.0
    %121 = vmatpush1.msra.mxu0 0.0
    %122 = vmatprep.subr.mxu0 0.0
    %123 = vmatpush1.msra.mxu0 0.0
    %124 = vmatprep.subr.mxu0 0.0
    %125 = vmatpush1.msra.mxu0 0.0
    %126 = vmatprep.subr.mxu0 0.0
    %127 = vmatpush1.msra.mxu0 0.0
    %128 = vmatprep.subr.mxu0 0.0
    %129 = vmatpush1.msra.mxu0 0.0
    %130 = vmatprep.subr.mxu0 0.0
    %131 = vmatpush1.msra.mxu0 0.0
    %132 = vmatprep.subr.mxu0 0.0
    %133 = vmatpush1.msra.mxu0 0.0
    %134 = vmatprep.subr.mxu0 0.0
    %135 = vmatpush1.msra.mxu0 0.0
    %136 = vmatprep.subr.mxu0 0.0
    %137 = vmatpush1.msra.mxu0 0.0
    %138 = vmatprep.subr.mxu0 0.0
    %139 = vmatpush1.msra.mxu0 0.0
    %140 = vmatprep.subr.mxu0 0.0
    %141 = vmatpush1.msra.mxu0 0.0
    %142 = vmatprep.subr.mxu0 0.0
    %143 = vmatpush1.msra.mxu0 0.0
    %144 = vmatprep.subr.mxu0 0.0
    %145 = vmatpush1.msra.mxu0 0.0
    %146 = vmatprep.subr.mxu0 0.0
    %147 = vmatpush1.msra.mxu0 0.0
    %148 = vmatprep.subr.mxu0 0.0
    %149 = vmatpush1.msra.mxu0 0.0
    %150 = vmatprep.mubr.f32.mxu0 0.0
    %151 = vmatmul.mubr.f32.gmra.mrb[0].mxu0 %v81
    %v152 = vpop.f32.mrb[0].mxu0
    %v153 = vadd.f32 %v77, %v152
    %v154 = vpop.f32.mrb[0].mxu0
    %155 = vmatprep.mubr.f32.mxu0 0.0
    %156 = vmatmul.mubr.f32.gmra.mrb[0].mxu0 %v84
    %v157 = vpop.f32.mrb[0].mxu0
    %v158 = vadd.f32 %v77, %v157
    %v159 = vpop.f32.mrb[0].mxu0
    %160 = vdwg.mxu0
    %v161 = vld [vmem:[%s4] sm:$0x1]
    %v163 = vlaneseq
    %v164 = vshrl.u32 %v163, 7
    %v165 = vsub.s32 0, %v164
    %v166 = vrot.slane %v161, %v165
    %168 = vmatprep.subr.mxu0 0.0
    %169 = vmatpush1.msra.mxu0 %v68
    %170 = vmatprep.subr.mxu0 0.0
    %171 = vmatpush1.msra.mxu0 %v69
    %172 = vmatprep.subr.mxu0 0.0
    %173 = vmatpush1.msra.mxu0 %v70
    %174 = vmatprep.subr.mxu0 0.0
    %175 = vmatpush1.msra.mxu0 %v71
    %176 = vmatprep.subr.mxu0 0.0
    %177 = vmatpush1.msra.mxu0 0.0
    %178 = vmatprep.subr.mxu0 0.0
    %179 = vmatpush1.msra.mxu0 0.0
    %180 = vmatprep.subr.mxu0 0.0
    %181 = vmatpush1.msra.mxu0 0.0
    %182 = vmatprep.subr.mxu0 0.0
    %183 = vmatpush1.msra.mxu0 0.0
    %184 = vmatprep.subr.mxu0 0.0
    %185 = vmatpush1.msra.mxu0 0.0
    %186 = vmatprep.subr.mxu0 0.0
    %187 = vmatpush1.msra.mxu0 0.0
    %188 = vmatprep.subr.mxu0 0.0
    %189 = vmatpush1.msra.mxu0 0.0
    %190 = vmatprep.subr.mxu0 0.0
    %191 = vmatpush1.msra.mxu0 0.0
    %192 = vmatprep.subr.mxu0 0.0
    %193 = vmatpush1.msra.mxu0 0.0
    %194 = vmatprep.subr.mxu0 0.0
    %195 = vmatpush1.msra.mxu0 0.0
    %196 = vmatprep.subr.mxu0 0.0
    %197 = vmatpush1.msra.mxu0 0.0
    %198 = vmatprep.subr.mxu0 0.0
    %199 = vmatpush1.msra.mxu0 0.0
    %200 = vmatprep.subr.mxu0 0.0
    %201 = vmatpush1.msra.mxu0 0.0
    %202 = vmatprep.subr.mxu0 0.0
    %203 = vmatpush1.msra.mxu0 0.0
    %204 = vmatprep.subr.mxu0 0.0
    %205 = vmatpush1.msra.mxu0 0.0
    %206 = vmatprep.subr.mxu0 0.0
    %207 = vmatpush1.msra.mxu0 0.0
    %208 = vmatprep.subr.mxu0 0.0
    %209 = vmatpush1.msra.mxu0 0.0
    %210 = vmatprep.subr.mxu0 0.0
    %211 = vmatpush1.msra.mxu0 0.0
    %212 = vmatprep.subr.mxu0 0.0
    %213 = vmatpush1.msra.mxu0 0.0
    %214 = vmatprep.subr.mxu0 0.0
    %215 = vmatpush1.msra.mxu0 0.0
    %216 = vmatprep.subr.mxu0 0.0
    %217 = vmatpush1.msra.mxu0 0.0
    %218 = vmatprep.subr.mxu0 0.0
    %219 = vmatpush1.msra.mxu0 0.0
    %220 = vmatprep.subr.mxu0 0.0
    %221 = vmatpush1.msra.mxu0 0.0
    %222 = vmatprep.subr.mxu0 0.0
    %223 = vmatpush1.msra.mxu0 0.0
    %224 = vmatprep.subr.mxu0 0.0
    %225 = vmatpush1.msra.mxu0 0.0
    %226 = vmatprep.subr.mxu0 0.0
    %227 = vmatpush1.msra.mxu0 0.0
    %228 = vmatprep.subr.mxu0 0.0
    %229 = vmatpush1.msra.mxu0 0.0
    %230 = vmatprep.subr.mxu0 0.0
    %231 = vmatpush1.msra.mxu0 0.0
    %232 = vmatprep.mubr.f32.mxu0 0.0
    %233 = vmatmul.mubr.f32.gmra.mrb[0].mxu0 %v81
    %v234 = vpop.f32.mrb[0].mxu0
    %v235 = vadd.f32 %v166, %v234
    %v236 = vpop.f32.mrb[0].mxu0
    %237 = vmatprep.mubr.f32.mxu0 0.0
    %238 = vmatmul.mubr.f32.gmra.mrb[0].mxu0 %v84
    %v239 = vpop.f32.mrb[0].mxu0
    %v240 = vadd.f32 %v166, %v239
    %v241 = vpop.f32.mrb[0].mxu0
    %242 = vdwg.mxu0
    %v243 = vmul.f32 %v235, 0.5
    %v244 = vmul.f32 %v240, 0.5
    %v245 = vmul.f32 %v235, 0.70710677
    %v246 = vmul.f32 %v240, 0.70710677
    %v247 = verf.f32.pop %v245
    %v248 = verf.f32.pop %v246
    %v249 = vadd.f32 %v247, 1.0
    %v250 = vadd.f32 %v248, 1.0
    %v251 = vmul.f32 %v243, %v249
    %v252 = vmul.f32 %v244, %v250
    %v253 = vmul.f32 %v153, %v251
    %v254 = vmul.f32 %v158, %v252
    %255 = vst.msk [vmem:[#allocation8] sm:$0xff] %vm79, %v253
    %256 = vst.msk [vmem:[#allocation8 + $0x8] sm:$0xff] %vm79, %v254
    // Predicated region
    $region34: #{tpu_custom_call.1} parent=1 // pred_check
      _
    $region35: #{tpu_custom_call.1} parent=1 // pred_check_branch
      %258 = sbr.rel (0) target = $region37
    $region36: #{tpu_custom_call.1} parent=1 // pred_region
      %s260 = ssub.s32 256, 256
      %261 = vsyncadd [#allocation4], %s260
      %s262 = sshll.u32 [#allocation8], 4
      %s263 = int_to_ptr.vmem [resolvable:$true] %s262
      %268 = dma.vmem_to_hbm [thread:$0]  %s263, 256, %s5, [#allocation4], 128, 128, 8
    $region37: #{tpu_custom_call.1} parent=1 // pred_fallthru
      _
    // Predicated region
    $region38: #{tpu_custom_call.1} parent=1 // pred_check
      _
    $region39: #{tpu_custom_call.1} parent=1 // pred_check_branch
      %270 = sbr.rel (0) target = $region41
    $region40: #{tpu_custom_call.1} parent=1 // pred_region
      %271 = dma.done [#allocation4], 256
    $region41: #{tpu_custom_call.1} parent=1 // pred_fallthru
      _
    %272 = vsyncpa [#allocation3], 1
    %273 = vsyncpa [#allocation6], 1
    %274 = vsyncpa [#allocation4], 1

</llo_original>
